<compile_context>
chip_gen: v5e
topology: v5e:2x2
jax: 0.10.0
libtpu: 0.0.40
codegen_flags: <defaults>
</compile_context>

<pallas_src>
import jax
import jax.numpy as jnp
from jax import lax
from jax.experimental import pallas as pl
from jax.experimental.pallas import tpu as pltpu


# ----------------------------------------------------------------------------
# Pallas kernel: full captioning forward (input proj + T-step RNN + out proj)
# ----------------------------------------------------------------------------
def _caption_rnn_kernel(
    emb_ref,      # (T*Bp, E)  embeddings, time-major rows (t*Bp + b)
    cnn_ref,      # (Bp, F)    raw CNN features (batch padded)
    w_in_ref,     # (F, H)     input_layer weight (pre-transposed)
    b_in_ref,     # (1, H)     input_layer bias
    w_e_ref,      # (E, H)     RNN-cell weight rows for the embedding part
    w_c_ref,      # (H, H)     RNN-cell weight rows for processed cnn features
    w_h_ref,      # (H, H)     RNN-cell weight rows for previous hidden state
    b_rnn_ref,    # (1, H)     RNN-cell bias
    w_out_ref,    # (H, Vp)    output_layer weight (pre-transposed, vocab padded)
    b_out_ref,    # (1, Vp)    output_layer bias (vocab padded)
    h0_ref,       # (Bp, H)    initial hidden state
    logits_ref,   # (T*Bp, Vp) output logits, time-major rows, lane-dense
    h_out_ref,    # (Bp, H)    final hidden state
    u_sc,         # VMEM (T*Bp, H) f32 : emb @ W_e for all timesteps
    h_all_sc,     # VMEM (T*Bp, H) f32 : hidden state of every timestep
):
    Bp, H = h0_ref.shape
    TB = emb_ref.shape[0]
    T = TB // Bp

    # (1) CNN input projection + LeakyReLU (slope 0.01); Dropout -> identity (eval).
    z = (
        jnp.dot(cnn_ref[...], w_in_ref[...], preferred_element_type=jnp.float32)
        + b_in_ref[...]
    )
    proc = jnp.where(z > 0, z, 0.01 * z)                      # (Bp, H)

    # (2) Loop-invariant additive term: proc @ W_c + b_rnn (same every timestep).
    c_term = (
        jnp.dot(proc, w_c_ref[...], preferred_element_type=jnp.float32)
        + b_rnn_ref[...]
    )                                                          # (Bp, H)

    # (3) Hoisted embedding projection for ALL timesteps in one matmul.
    u_sc[...] = jnp.dot(
        emb_ref[...], w_e_ref[...], preferred_element_type=jnp.float32
    )                                                          # (T*Bp, H)

    w_h = w_h_ref[...]                                         # (H, H), loaded once

    # (4) Serial recurrence: only h @ W_h remains on the critical path.
    def step(t, h):
        r = pl.multiple_of(t * Bp, Bp)
        pre = (
            u_sc[pl.ds(r, Bp), :]
            + c_term
            + jnp.dot(h, w_h, preferred_element_type=jnp.float32)
        )
        h_new = jnp.tanh(pre)
        h_all_sc[pl.ds(r, Bp), :] = h_new
        return h_new

    h_final = lax.fori_loop(
        0, T, step, h0_ref[...].astype(jnp.float32), unroll=True
    )
    h_out_ref[...] = h_final.astype(h_out_ref.dtype)

    # (5) Batched output projection: one (T*Bp, H) x (H, Vp) matmul,
    #     one lane-dense un-masked write-back.
    logits_ref[...] = (
        jnp.dot(h_all_sc[...], w_out_ref[...], preferred_element_type=jnp.float32)
        + b_out_ref[...]
    ).astype(logits_ref.dtype)


# ----------------------------------------------------------------------------
# Wrapper (plain-JAX glue: embedding gather, padding, layout, param plumbing)
# ----------------------------------------------------------------------------
def image_caption_forward(cnn_features, x_tokens, params, current_hidden_state=None):
    """
    cnn_features: [B, F] float32
    x_tokens:     [B, T] int32
    returns (logits [B, T, V], hidden_state [1, B, H])
    """
    B, T = x_tokens.shape
    F = cnn_features.shape[1]
    E = params["emb_table"].shape[1]
    H = params["w_rnn"].shape[1]
    V = params["w_out_t"].shape[1]

    SUB, LANE = 8, 128                      # f32 sublane / lane tiles
    Bp = ((B + SUB - 1) // SUB) * SUB       # padded batch (2 -> 8)
    Vp = ((V + LANE - 1) // LANE) * LANE    # padded vocab (40 -> 128), lane-dense out

    # Embedding lookup (glue), time-major, batch-padded, flattened to (T*Bp, E).
    emb_all = jnp.take(params["emb_table"], x_tokens, axis=0)       # (B, T, E)
    emb_tbe = jnp.transpose(emb_all, (1, 0, 2))                     # (T, B, E)
    emb_tbe = jnp.pad(emb_tbe, ((0, 0), (0, Bp - B), (0, 0)))       # (T, Bp, E)
    emb_flat = emb_tbe.reshape(T * Bp, E)

    cnn_p = jnp.pad(cnn_features, ((0, Bp - B), (0, 0)))            # (Bp, F)

    if current_hidden_state is None:
        h0 = jnp.zeros((Bp, H), jnp.float32)
    else:
        h0 = jnp.pad(
            current_hidden_state.reshape(B, H).astype(jnp.float32),
            ((0, Bp - B), (0, 0)),
        )

    # Split the RNN-cell weight [E + nn_map(H) + H, H] into its three row blocks.
    w_rnn = params["w_rnn"]
    w_e = w_rnn[:E]               # (E, H)
    w_c = w_rnn[E : E + H]        # (H, H)   (nn_map_size == H)
    w_h = w_rnn[E + H :]          # (H, H)

    # Pad the output projection to a lane-dense Vp.
    w_out_p = jnp.pad(params["w_out_t"], ((0, 0), (0, Vp - V)))     # (H, Vp)
    b_out_p = jnp.pad(params["b_out"], ((0, 0), (0, Vp - V)))       # (1, Vp)

    logits_flat, h_final = pl.pallas_call(
        _caption_rnn_kernel,
        out_shape=(
            jax.ShapeDtypeStruct((T * Bp, Vp), jnp.float32),
            jax.ShapeDtypeStruct((Bp, H), jnp.float32),
        ),
        scratch_shapes=[
            pltpu.VMEM((T * Bp, H), jnp.float32),   # u = emb @ W_e (all timesteps)
            pltpu.VMEM((T * Bp, H), jnp.float32),   # stacked hidden states
        ],
    )(
        emb_flat,
        cnn_p,
        params["w_in_t"],
        params["b_in"],
        w_e,
        w_c,
        w_h,
        params["b_rnn"],
        w_out_p,
        b_out_p,
        h0,
    )

    # Un-pad and move to caller layout (tiny: 2.5 KB of real logits).
    logits = jnp.transpose(
        logits_flat.reshape(T, Bp, Vp)[:, :B, :V], (1, 0, 2)
    )                                                             # (B, T, V)
    hidden_state = h_final[:B][None]                              # (1, B, H)
    return logits, hidden_state


# ----------------------------------------------------------------------------
# Deterministic parameter construction (mirrors module __init__ shapes)
# ----------------------------------------------------------------------------
def make_params(key, vocab, emb, n_cnn_feat, hidden):
    nn_map = hidden  # reference shapes only work when hidden == nn_map_size
    k = jax.random.split(key, 6)
    return {
        # nn.Embedding(vocab, emb)
        "emb_table": jax.random.normal(k[0], (vocab, emb), jnp.float32) * 0.1,
        # nn.Linear(n_cnn_feat, hidden) -- stored pre-transposed as (in, out)
        "w_in_t": jax.random.normal(k[1], (n_cnn_feat, hidden), jnp.float32)
        / jnp.sqrt(n_cnn_feat),
        "b_in": jnp.zeros((1, hidden), jnp.float32),
        # RNNsimpleCell weight [emb + nn_map + hidden, hidden], variance scaling
        "w_rnn": jax.random.normal(k[2], (emb + nn_map + hidden, hidden), jnp.float32)
        / jnp.sqrt(emb + nn_map + hidden),
        "b_rnn": jnp.zeros((1, hidden), jnp.float32),
        # nn.Linear(hidden, vocab) -- stored pre-transposed as (in, out)
        "w_out_t": jax.random.normal(k[3], (hidden, vocab), jnp.float32)
        / jnp.sqrt(hidden),
        "b_out": jnp.zeros((1, vocab), jnp.float32),
    }


# ----------------------------------------------------------------------------
# Pure-JAX reference (mirrors the PyTorch forward, eval-mode dropout)
# ----------------------------------------------------------------------------
def reference_forward(cnn_features, x_tokens, params):
    B, T = x_tokens.shape
    E = params["emb_table"].shape[1]
    H = params["w_rnn"].shape[1]
    z = cnn_features @ params["w_in_t"] + params["b_in"]
    proc = jnp.where(z > 0, z, 0.01 * z)
    emb_all = jnp.take(params["emb_table"], x_tokens, axis=0)
    h = jnp.zeros((B, H), jnp.float32)
    logits_seq = []
    for i in range(T):
        x2 = jnp.concatenate([emb_all[:, i, :], proc, h], axis=1)
        h = jnp.tanh(x2 @ params["w_rnn"] + params["b_rnn"])
        logits_seq.append(h @ params["w_out_t"] + params["b_out"])
    return jnp.stack(logits_seq, axis=1), h[None]


if __name__ == "__main__":
    # Small config consistent with the module's forward pass.
    VOCAB, EMB, N_CNN, HIDDEN = 40, 16, 64, 32
    B, T = 2, 8

    key = jax.random.PRNGKey(0)
    kp, kc, kt = jax.random.split(key, 3)
    params = make_params(kp, VOCAB, EMB, N_CNN, HIDDEN)

    cnn_features = jax.random.normal(kc, (B, N_CNN), jnp.float32)
    x_tokens = jax.random.randint(kt, (B, T), 0, VOCAB, jnp.int32)

    logits, hidden = image_caption_forward(cnn_features, x_tokens, params)
    logits = jax.block_until_ready(logits)
    hidden = jax.block_until_ready(hidden)

    assert logits.shape == (B, T, VOCAB), logits.shape
    assert hidden.shape == (1, B, HIDDEN), hidden.shape

    ref_logits, ref_hidden = reference_forward(cnn_features, x_tokens, params)
    assert jnp.allclose(logits, ref_logits, atol=1e-4, rtol=1e-4)
    assert jnp.allclose(hidden, ref_hidden, atol=1e-4, rtol=1e-4)

    print("KERNEL_OK")
</pallas_src>

<mosaic_0001>
module attributes {stable_mosaic.version = 11 : i64} {
  func.func @_caption_rnn_kernel(%arg0: memref<64x16xf32, #tpu.memory_space<vmem>>, %arg1: memref<8x64xf32, #tpu.memory_space<vmem>>, %arg2: memref<64x32xf32, #tpu.memory_space<vmem>>, %arg3: memref<1x32xf32, #tpu.memory_space<vmem>>, %arg4: memref<16x32xf32, #tpu.memory_space<vmem>>, %arg5: memref<32x32xf32, #tpu.memory_space<vmem>>, %arg6: memref<32x32xf32, #tpu.memory_space<vmem>>, %arg7: memref<1x32xf32, #tpu.memory_space<vmem>>, %arg8: memref<32x128xf32, #tpu.memory_space<vmem>>, %arg9: memref<1x128xf32, #tpu.memory_space<vmem>>, %arg10: memref<8x32xf32, #tpu.memory_space<vmem>>, %arg11: memref<64x128xf32, #tpu.memory_space<vmem>>, %arg12: memref<8x32xf32, #tpu.memory_space<vmem>>, %arg13: memref<64x32xf32, #tpu.memory_space<vmem>>, %arg14: memref<64x32xf32, #tpu.memory_space<vmem>>) attributes {dimension_semantics = [], scalar_prefetch = 0 : i64, scratch_operands = 2 : i64, tpu.core_type = #tpu.core_type<tc>} {
    %c0 = arith.constant 0 : index
    %c0_0 = arith.constant 0 : index
    %0 = vector.load %arg1[%c0, %c0_0] : memref<8x64xf32, #tpu.memory_space<vmem>>, vector<8x64xf32>
    %c0_1 = arith.constant 0 : index
    %c0_2 = arith.constant 0 : index
    %1 = vector.load %arg2[%c0_1, %c0_2] : memref<64x32xf32, #tpu.memory_space<vmem>>, vector<64x32xf32>
    %cst = arith.constant dense<0.000000e+00> : vector<8x32xf32>
    %2 = tpu.matmul %0, %1, %cst {dimension_numbers = #tpu.dot_dimension_numbers<[1], [0], [0], [1], [0, 0, 1, 1], [], []>} : vector<8x64xf32>, vector<64x32xf32>, vector<8x32xf32> -> vector<8x32xf32>
    %c0_3 = arith.constant 0 : index
    %c0_4 = arith.constant 0 : index
    %3 = vector.load %arg3[%c0_3, %c0_4] : memref<1x32xf32, #tpu.memory_space<vmem>>, vector<1x32xf32>
    %4 = vector.broadcast %3 : vector<1x32xf32> to vector<8x32xf32>
    %5 = arith.addf %2, %4 : vector<8x32xf32>
    %cst_5 = arith.constant 0.000000e+00 : f32
    %6 = vector.broadcast %cst_5 : f32 to vector<8x32xf32>
    %7 = arith.cmpf ogt, %5, %6 : vector<8x32xf32>
    %cst_6 = arith.constant 0.00999999977 : f32
    %8 = vector.broadcast %cst_6 : f32 to vector<8x32xf32>
    %9 = arith.mulf %8, %5 : vector<8x32xf32>
    %10 = arith.select %7, %5, %9 : vector<8x32xi1>, vector<8x32xf32>
    %c0_7 = arith.constant 0 : index
    %c0_8 = arith.constant 0 : index
    %11 = vector.load %arg5[%c0_7, %c0_8] : memref<32x32xf32, #tpu.memory_space<vmem>>, vector<32x32xf32>
    %cst_9 = arith.constant dense<0.000000e+00> : vector<8x32xf32>
    %12 = tpu.matmul %10, %11, %cst_9 {dimension_numbers = #tpu.dot_dimension_numbers<[1], [0], [0], [1], [0, 0, 1, 1], [], []>} : vector<8x32xf32>, vector<32x32xf32>, vector<8x32xf32> -> vector<8x32xf32>
    %c0_10 = arith.constant 0 : index
    %c0_11 = arith.constant 0 : index
    %13 = vector.load %arg7[%c0_10, %c0_11] : memref<1x32xf32, #tpu.memory_space<vmem>>, vector<1x32xf32>
    %14 = vector.broadcast %13 : vector<1x32xf32> to vector<8x32xf32>
    %15 = arith.addf %12, %14 : vector<8x32xf32>
    %c0_12 = arith.constant 0 : index
    %c0_13 = arith.constant 0 : index
    %16 = vector.load %arg0[%c0_12, %c0_13] : memref<64x16xf32, #tpu.memory_space<vmem>>, vector<64x16xf32>
    %c0_14 = arith.constant 0 : index
    %c0_15 = arith.constant 0 : index
    %17 = vector.load %arg4[%c0_14, %c0_15] : memref<16x32xf32, #tpu.memory_space<vmem>>, vector<16x32xf32>
    %cst_16 = arith.constant dense<0.000000e+00> : vector<64x32xf32>
    %18 = tpu.matmul %16, %17, %cst_16 {dimension_numbers = #tpu.dot_dimension_numbers<[1], [0], [0], [1], [0, 0, 1, 1], [], []>} : vector<64x16xf32>, vector<16x32xf32>, vector<64x32xf32> -> vector<64x32xf32>
    %c0_17 = arith.constant 0 : index
    %c0_18 = arith.constant 0 : index
    %19 = vector.load %arg13[%c0_17, %c0_18] : memref<64x32xf32, #tpu.memory_space<vmem>>, vector<64x32xf32>
    tpu.vector_store %arg13[%c0_17, %c0_18], %18 {strides = array<i32>} : memref<64x32xf32, #tpu.memory_space<vmem>>, vector<64x32xf32>,
    %c0_19 = arith.constant 0 : index
    %c0_20 = arith.constant 0 : index
    %20 = vector.load %arg6[%c0_19, %c0_20] : memref<32x32xf32, #tpu.memory_space<vmem>>, vector<32x32xf32>
    %c0_21 = arith.constant 0 : index
    %c0_22 = arith.constant 0 : index
    %21 = vector.load %arg10[%c0_21, %c0_22] : memref<8x32xf32, #tpu.memory_space<vmem>>, vector<8x32xf32>
    %c0_i32 = arith.constant 0 : i32
    %c8_i32 = arith.constant 8 : i32
    %22 = arith.muli %c0_i32, %c8_i32 : i32
    %23 = tpu.assume_multiple %22, 8 : i32
    %24 = arith.index_cast %23 : i32 to index
    %c0_23 = arith.constant 0 : index
    %25 = vector.load %arg13[%24, %c0_23] : memref<64x32xf32, #tpu.memory_space<vmem>>, vector<8x32xf32>
    %26 = arith.addf %25, %15 : vector<8x32xf32>
    %cst_24 = arith.constant dense<0.000000e+00> : vector<8x32xf32>
    %27 = tpu.matmul %21, %20, %cst_24 {dimension_numbers = #tpu.dot_dimension_numbers<[1], [0], [0], [1], [0, 0, 1, 1], [], []>} : vector<8x32xf32>, vector<32x32xf32>, vector<8x32xf32> -> vector<8x32xf32>
    %28 = arith.addf %26, %27 : vector<8x32xf32>
    %29 = math.tanh %28 : vector<8x32xf32>
    %30 = arith.index_cast %23 : i32 to index
    %c0_25 = arith.constant 0 : index
    %31 = vector.load %arg14[%30, %c0_25] : memref<64x32xf32, #tpu.memory_space<vmem>>, vector<8x32xf32>
    tpu.vector_store %arg14[%30, %c0_25], %29 {strides = array<i32>} : memref<64x32xf32, #tpu.memory_space<vmem>>, vector<8x32xf32>,
    %c1_i32 = arith.constant 1 : i32
    %c8_i32_26 = arith.constant 8 : i32
    %32 = arith.muli %c1_i32, %c8_i32_26 : i32
    %33 = tpu.assume_multiple %32, 8 : i32
    %34 = arith.index_cast %33 : i32 to index
    %c0_27 = arith.constant 0 : index
    %35 = vector.load %arg13[%34, %c0_27] : memref<64x32xf32, #tpu.memory_space<vmem>>, vector<8x32xf32>
    %36 = arith.addf %35, %15 : vector<8x32xf32>
    %cst_28 = arith.constant dense<0.000000e+00> : vector<8x32xf32>
    %37 = tpu.matmul %29, %20, %cst_28 {dimension_numbers = #tpu.dot_dimension_numbers<[1], [0], [0], [1], [0, 0, 1, 1], [], []>} : vector<8x32xf32>, vector<32x32xf32>, vector<8x32xf32> -> vector<8x32xf32>
    %38 = arith.addf %36, %37 : vector<8x32xf32>
    %39 = math.tanh %38 : vector<8x32xf32>
    %40 = arith.index_cast %33 : i32 to index
    %c0_29 = arith.constant 0 : index
    %41 = vector.load %arg14[%40, %c0_29] : memref<64x32xf32, #tpu.memory_space<vmem>>, vector<8x32xf32>
    tpu.vector_store %arg14[%40, %c0_29], %39 {strides = array<i32>} : memref<64x32xf32, #tpu.memory_space<vmem>>, vector<8x32xf32>,
    %c2_i32 = arith.constant 2 : i32
    %c8_i32_30 = arith.constant 8 : i32
    %42 = arith.muli %c2_i32, %c8_i32_30 : i32
    %43 = tpu.assume_multiple %42, 8 : i32
    %44 = arith.index_cast %43 : i32 to index
    %c0_31 = arith.constant 0 : index
    %45 = vector.load %arg13[%44, %c0_31] : memref<64x32xf32, #tpu.memory_space<vmem>>, vector<8x32xf32>
    %46 = arith.addf %45, %15 : vector<8x32xf32>
    %cst_32 = arith.constant dense<0.000000e+00> : vector<8x32xf32>
    %47 = tpu.matmul %39, %20, %cst_32 {dimension_numbers = #tpu.dot_dimension_numbers<[1], [0], [0], [1], [0, 0, 1, 1], [], []>} : vector<8x32xf32>, vector<32x32xf32>, vector<8x32xf32> -> vector<8x32xf32>
    %48 = arith.addf %46, %47 : vector<8x32xf32>
    %49 = math.tanh %48 : vector<8x32xf32>
    %50 = arith.index_cast %43 : i32 to index
    %c0_33 = arith.constant 0 : index
    %51 = vector.load %arg14[%50, %c0_33] : memref<64x32xf32, #tpu.memory_space<vmem>>, vector<8x32xf32>
    tpu.vector_store %arg14[%50, %c0_33], %49 {strides = array<i32>} : memref<64x32xf32, #tpu.memory_space<vmem>>, vector<8x32xf32>,
    %c3_i32 = arith.constant 3 : i32
    %c8_i32_34 = arith.constant 8 : i32
    %52 = arith.muli %c3_i32, %c8_i32_34 : i32
    %53 = tpu.assume_multiple %52, 8 : i32
    %54 = arith.index_cast %53 : i32 to index
    %c0_35 = arith.constant 0 : index
    %55 = vector.load %arg13[%54, %c0_35] : memref<64x32xf32, #tpu.memory_space<vmem>>, vector<8x32xf32>
    %56 = arith.addf %55, %15 : vector<8x32xf32>
    %cst_36 = arith.constant dense<0.000000e+00> : vector<8x32xf32>
    %57 = tpu.matmul %49, %20, %cst_36 {dimension_numbers = #tpu.dot_dimension_numbers<[1], [0], [0], [1], [0, 0, 1, 1], [], []>} : vector<8x32xf32>, vector<32x32xf32>, vector<8x32xf32> -> vector<8x32xf32>
    %58 = arith.addf %56, %57 : vector<8x32xf32>
    %59 = math.tanh %58 : vector<8x32xf32>
    %60 = arith.index_cast %53 : i32 to index
    %c0_37 = arith.constant 0 : index
    %61 = vector.load %arg14[%60, %c0_37] : memref<64x32xf32, #tpu.memory_space<vmem>>, vector<8x32xf32>
    tpu.vector_store %arg14[%60, %c0_37], %59 {strides = array<i32>} : memref<64x32xf32, #tpu.memory_space<vmem>>, vector<8x32xf32>,
    %c4_i32 = arith.constant 4 : i32
    %c8_i32_38 = arith.constant 8 : i32
    %62 = arith.muli %c4_i32, %c8_i32_38 : i32
    %63 = tpu.assume_multiple %62, 8 : i32
    %64 = arith.index_cast %63 : i32 to index
    %c0_39 = arith.constant 0 : index
    %65 = vector.load %arg13[%64, %c0_39] : memref<64x32xf32, #tpu.memory_space<vmem>>, vector<8x32xf32>
    %66 = arith.addf %65, %15 : vector<8x32xf32>
    %cst_40 = arith.constant dense<0.000000e+00> : vector<8x32xf32>
    %67 = tpu.matmul %59, %20, %cst_40 {dimension_numbers = #tpu.dot_dimension_numbers<[1], [0], [0], [1], [0, 0, 1, 1], [], []>} : vector<8x32xf32>, vector<32x32xf32>, vector<8x32xf32> -> vector<8x32xf32>
    %68 = arith.addf %66, %67 : vector<8x32xf32>
    %69 = math.tanh %68 : vector<8x32xf32>
    %70 = arith.index_cast %63 : i32 to index
    %c0_41 = arith.constant 0 : index
    %71 = vector.load %arg14[%70, %c0_41] : memref<64x32xf32, #tpu.memory_space<vmem>>, vector<8x32xf32>
    tpu.vector_store %arg14[%70, %c0_41], %69 {strides = array<i32>} : memref<64x32xf32, #tpu.memory_space<vmem>>, vector<8x32xf32>,
    %c5_i32 = arith.constant 5 : i32
    %c8_i32_42 = arith.constant 8 : i32
    %72 = arith.muli %c5_i32, %c8_i32_42 : i32
    %73 = tpu.assume_multiple %72, 8 : i32
    %74 = arith.index_cast %73 : i32 to index
    %c0_43 = arith.constant 0 : index
    %75 = vector.load %arg13[%74, %c0_43] : memref<64x32xf32, #tpu.memory_space<vmem>>, vector<8x32xf32>
    %76 = arith.addf %75, %15 : vector<8x32xf32>
    %cst_44 = arith.constant dense<0.000000e+00> : vector<8x32xf32>
    %77 = tpu.matmul %69, %20, %cst_44 {dimension_numbers = #tpu.dot_dimension_numbers<[1], [0], [0], [1], [0, 0, 1, 1], [], []>} : vector<8x32xf32>, vector<32x32xf32>, vector<8x32xf32> -> vector<8x32xf32>
    %78 = arith.addf %76, %77 : vector<8x32xf32>
    %79 = math.tanh %78 : vector<8x32xf32>
    %80 = arith.index_cast %73 : i32 to index
    %c0_45 = arith.constant 0 : index
    %81 = vector.load %arg14[%80, %c0_45] : memref<64x32xf32, #tpu.memory_space<vmem>>, vector<8x32xf32>
    tpu.vector_store %arg14[%80, %c0_45], %79 {strides = array<i32>} : memref<64x32xf32, #tpu.memory_space<vmem>>, vector<8x32xf32>,
    %c6_i32 = arith.constant 6 : i32
    %c8_i32_46 = arith.constant 8 : i32
    %82 = arith.muli %c6_i32, %c8_i32_46 : i32
    %83 = tpu.assume_multiple %82, 8 : i32
    %84 = arith.index_cast %83 : i32 to index
    %c0_47 = arith.constant 0 : index
    %85 = vector.load %arg13[%84, %c0_47] : memref<64x32xf32, #tpu.memory_space<vmem>>, vector<8x32xf32>
    %86 = arith.addf %85, %15 : vector<8x32xf32>
    %cst_48 = arith.constant dense<0.000000e+00> : vector<8x32xf32>
    %87 = tpu.matmul %79, %20, %cst_48 {dimension_numbers = #tpu.dot_dimension_numbers<[1], [0], [0], [1], [0, 0, 1, 1], [], []>} : vector<8x32xf32>, vector<32x32xf32>, vector<8x32xf32> -> vector<8x32xf32>
    %88 = arith.addf %86, %87 : vector<8x32xf32>
    %89 = math.tanh %88 : vector<8x32xf32>
    %90 = arith.index_cast %83 : i32 to index
    %c0_49 = arith.constant 0 : index
    %91 = vector.load %arg14[%90, %c0_49] : memref<64x32xf32, #tpu.memory_space<vmem>>, vector<8x32xf32>
    tpu.vector_store %arg14[%90, %c0_49], %89 {strides = array<i32>} : memref<64x32xf32, #tpu.memory_space<vmem>>, vector<8x32xf32>,
    %c7_i32 = arith.constant 7 : i32
    %c8_i32_50 = arith.constant 8 : i32
    %92 = arith.muli %c7_i32, %c8_i32_50 : i32
    %93 = tpu.assume_multiple %92, 8 : i32
    %94 = arith.index_cast %93 : i32 to index
    %c0_51 = arith.constant 0 : index
    %95 = vector.load %arg13[%94, %c0_51] : memref<64x32xf32, #tpu.memory_space<vmem>>, vector<8x32xf32>
    %96 = arith.addf %95, %15 : vector<8x32xf32>
    %cst_52 = arith.constant dense<0.000000e+00> : vector<8x32xf32>
    %97 = tpu.matmul %89, %20, %cst_52 {dimension_numbers = #tpu.dot_dimension_numbers<[1], [0], [0], [1], [0, 0, 1, 1], [], []>} : vector<8x32xf32>, vector<32x32xf32>, vector<8x32xf32> -> vector<8x32xf32>
    %98 = arith.addf %96, %97 : vector<8x32xf32>
    %99 = math.tanh %98 : vector<8x32xf32>
    %100 = arith.index_cast %93 : i32 to index
    %c0_53 = arith.constant 0 : index
    %101 = vector.load %arg14[%100, %c0_53] : memref<64x32xf32, #tpu.memory_space<vmem>>, vector<8x32xf32>
    tpu.vector_store %arg14[%100, %c0_53], %99 {strides = array<i32>} : memref<64x32xf32, #tpu.memory_space<vmem>>, vector<8x32xf32>,
    %c8_i32_54 = arith.constant 8 : i32
    %c0_55 = arith.constant 0 : index
    %c0_56 = arith.constant 0 : index
    %102 = vector.load %arg12[%c0_55, %c0_56] : memref<8x32xf32, #tpu.memory_space<vmem>>, vector<8x32xf32>
    tpu.vector_store %arg12[%c0_55, %c0_56], %99 {strides = array<i32>} : memref<8x32xf32, #tpu.memory_space<vmem>>, vector<8x32xf32>,
    %c0_57 = arith.constant 0 : index
    %c0_58 = arith.constant 0 : index
    %103 = vector.load %arg14[%c0_57, %c0_58] : memref<64x32xf32, #tpu.memory_space<vmem>>, vector<64x32xf32>
    %c0_59 = arith.constant 0 : index
    %c0_60 = arith.constant 0 : index
    %104 = vector.load %arg8[%c0_59, %c0_60] : memref<32x128xf32, #tpu.memory_space<vmem>>, vector<32x128xf32>
    %cst_61 = arith.constant dense<0.000000e+00> : vector<64x128xf32>
    %105 = tpu.matmul %103, %104, %cst_61 {dimension_numbers = #tpu.dot_dimension_numbers<[1], [0], [0], [1], [0, 0, 1, 1], [], []>} : vector<64x32xf32>, vector<32x128xf32>, vector<64x128xf32> -> vector<64x128xf32>
    %c0_62 = arith.constant 0 : index
    %c0_63 = arith.constant 0 : index
    %106 = vector.load %arg9[%c0_62, %c0_63] : memref<1x128xf32, #tpu.memory_space<vmem>>, vector<1x128xf32>
    %107 = vector.broadcast %106 : vector<1x128xf32> to vector<64x128xf32>
    %108 = arith.addf %105, %107 : vector<64x128xf32>
    %c0_64 = arith.constant 0 : index
    %c0_65 = arith.constant 0 : index
    %109 = vector.load %arg11[%c0_64, %c0_65] : memref<64x128xf32, #tpu.memory_space<vmem>>, vector<64x128xf32>
    tpu.vector_store %arg11[%c0_64, %c0_65], %108 {strides = array<i32>} : memref<64x128xf32, #tpu.memory_space<vmem>>, vector<64x128xf32>,
    return
  }
}

</mosaic_0001>

<llo_original>
// kernel: tpu_custom_call.1
$region0: #{tpu_custom_call.1}
  #allocation0 [shape = 'u32[]', space=smem, size = 0x4, offset = 0x4, fixed_abs, tag = 'smem constant byte address 0x4 - core index']
  #allocation1 [shape = 'u32[72,128]{1,0:T(1,128)}', space=vmem, size = 0x9000, scoped, tag = 'internal scratch']
  #allocation2 [shape = 'f32[64,32]{1,0:T(8,128)}', space=vmem, size = 0x8000, scoped, tag = 'scratch operand']
  #allocation3 [shape = 'f32[64,32]{1,0:T(8,128)}', space=vmem, size = 0x8000, scoped, tag = 'scratch operand']
  %s0 = inlined_call_operand.vmem [shape: f32[64,16], index: 0, kind: input, shape index: {}]
  %s1 = inlined_call_operand.vmem [shape: f32[8,64], index: 1, kind: input, shape index: {}]
  %s2 = inlined_call_operand.vmem [shape: f32[64,32], index: 2, kind: input, shape index: {}]
  %s3 = inlined_call_operand.vmem [shape: f32[1,32], index: 3, kind: input, shape index: {}]
  %s4 = inlined_call_operand.vmem [shape: f32[16,32], index: 4, kind: input, shape index: {}]
  %s5 = inlined_call_operand.vmem [shape: f32[32,32], index: 5, kind: input, shape index: {}]
  %s6 = inlined_call_operand.vmem [shape: f32[32,32], index: 6, kind: input, shape index: {}]
  %s7 = inlined_call_operand.vmem [shape: f32[1,32], index: 7, kind: input, shape index: {}]
  %s8 = inlined_call_operand.vmem [shape: f32[32,128], index: 8, kind: input, shape index: {}]
  %s9 = inlined_call_operand.vmem [shape: f32[1,128], index: 9, kind: input, shape index: {}]
  %s10 = inlined_call_operand.vmem [shape: f32[8,32], index: 10, kind: input, shape index: {}]
  %s11 = inlined_call_operand.hbm [shape: f32[64,128], index: 11, kind: output, shape index: {0}]
  %s12 = inlined_call_operand.hbm [shape: f32[8,32], index: 12, kind: output, shape index: {1}]
  %13 = xla_tuple %s11, %s12
  %s14 = sld [smem:[#allocation0]]
  $region62: #{tpu_custom_call.1} parent=0
    _
  %s16 = ssub.s32 1, %s14
  %s17 = scalar_select 0, %s16, %s14
  $region1: #{tpu_custom_call.1} parent=0
    #allocation4 [shape = 'u8[32768]{0}', space=vmem, size = 0x8000, scoped, tag = 'output window, operand 0, single buffered']
    #allocation5 [shape = 's32[1]{0}', space=sflag, size = 0x4, scoped, tag = 'scoped memory for tpu_custom_call.1']
    #allocation6 [shape = 'u8[4096]{0}', space=vmem, size = 0x1000, scoped, tag = 'output window, operand 1, single buffered']
    #allocation7 [shape = 's32[1]{0}', space=sflag, size = 0x4, scoped, tag = 'scoped memory for tpu_custom_call.1']
    %18 = vsyncpa [#allocation5], 0
    %19 = vsyncpa [#allocation7], 0
    // Predicated region
    $region2: #{tpu_custom_call.1} parent=1 // pred_check
      _
    $region3: #{tpu_custom_call.1} parent=1 // pred_check_branch
      %21 = sbr.rel (0) target = $region5
    $region4: #{tpu_custom_call.1} parent=1 // pred_region
      _
    $region5: #{tpu_custom_call.1} parent=1 // pred_fallthru
      _
    // Predicated region
    $region6: #{tpu_custom_call.1} parent=1 // pred_check
      _
    $region7: #{tpu_custom_call.1} parent=1 // pred_check_branch
      %23 = sbr.rel (0) target = $region9
    $region8: #{tpu_custom_call.1} parent=1 // pred_region
      _
    $region9: #{tpu_custom_call.1} parent=1 // pred_fallthru
      _
    // Predicated region
    $region10: #{tpu_custom_call.1} parent=1 // pred_check
      _
    $region11: #{tpu_custom_call.1} parent=1 // pred_check_branch
      %25 = sbr.rel (0) target = $region13
    $region12: #{tpu_custom_call.1} parent=1 // pred_region
      _
    $region13: #{tpu_custom_call.1} parent=1 // pred_fallthru
      _
    // Predicated region
    $region14: #{tpu_custom_call.1} parent=1 // pred_check
      _
    $region15: #{tpu_custom_call.1} parent=1 // pred_check_branch
      %27 = sbr.rel (0) target = $region17
    $region16: #{tpu_custom_call.1} parent=1 // pred_region
      _
    $region17: #{tpu_custom_call.1} parent=1 // pred_fallthru
      _
    // Predicated region
    $region18: #{tpu_custom_call.1} parent=1 // pred_check
      _
    $region19: #{tpu_custom_call.1} parent=1 // pred_check_branch
      %29 = sbr.rel (0) target = $region21
    $region20: #{tpu_custom_call.1} parent=1 // pred_region
      _
    $region21: #{tpu_custom_call.1} parent=1 // pred_fallthru
      _
    // Predicated region
    $region22: #{tpu_custom_call.1} parent=1 // pred_check
      _
    $region23: #{tpu_custom_call.1} parent=1 // pred_check_branch
      %31 = sbr.rel (0) target = $region25
    $region24: #{tpu_custom_call.1} parent=1 // pred_region
      _
    $region25: #{tpu_custom_call.1} parent=1 // pred_fallthru
      _
    // Predicated region
    $region26: #{tpu_custom_call.1} parent=1 // pred_check
      _
    $region27: #{tpu_custom_call.1} parent=1 // pred_check_branch
      %33 = sbr.rel (0) target = $region29
    $region28: #{tpu_custom_call.1} parent=1 // pred_region
      _
    $region29: #{tpu_custom_call.1} parent=1 // pred_fallthru
      _
    // Predicated region
    $region30: #{tpu_custom_call.1} parent=1 // pred_check
      _
    $region31: #{tpu_custom_call.1} parent=1 // pred_check_branch
      %35 = sbr.rel (0) target = $region33
    $region32: #{tpu_custom_call.1} parent=1 // pred_region
      _
    $region33: #{tpu_custom_call.1} parent=1 // pred_fallthru
      _
    // Predicated region
    $region34: #{tpu_custom_call.1} parent=1 // pred_check
      _
    $region35: #{tpu_custom_call.1} parent=1 // pred_check_branch
      %37 = sbr.rel (0) target = $region37
    $region36: #{tpu_custom_call.1} parent=1 // pred_region
      _
    $region37: #{tpu_custom_call.1} parent=1 // pred_fallthru
      _
    // Predicated region
    $region38: #{tpu_custom_call.1} parent=1 // pred_check
      _
    $region39: #{tpu_custom_call.1} parent=1 // pred_check_branch
      %39 = sbr.rel (0) target = $region41
    $region40: #{tpu_custom_call.1} parent=1 // pred_region
      _
    $region41: #{tpu_custom_call.1} parent=1 // pred_fallthru
      _
    // Predicated region
    $region42: #{tpu_custom_call.1} parent=1 // pred_check
      _
    $region43: #{tpu_custom_call.1} parent=1 // pred_check_branch
      %41 = sbr.rel (0) target = $region45
    $region44: #{tpu_custom_call.1} parent=1 // pred_region
      _
    $region45: #{tpu_custom_call.1} parent=1 // pred_fallthru
      _
    %v42 = vld [vmem:[%s1] sm:$0xff]
    %v43 = vld [vmem:[%s2] sm:$0xff]
    %v44 = vld [vmem:[%s2 + $0x8] sm:$0xff]
    %v45 = vld [vmem:[%s2 + $0x10] sm:$0xff]
    %v46 = vld [vmem:[%s2 + $0x18] sm:$0xff]
    %v47 = vld [vmem:[%s2 + $0x20] sm:$0xff]
    %v48 = vld [vmem:[%s2 + $0x28] sm:$0xff]
    %v49 = vld [vmem:[%s2 + $0x30] sm:$0xff]
    %v50 = vld [vmem:[%s2 + $0x38] sm:$0xff]
    %v51 = vld [vmem:[%s3] sm:$0x1]
    %v53 = vperm.slane %v51, 0
    %vm55 = vcmask 523264
    %v57 = vsel %vm55, %v42, 0
    %59 = vmatpush.msra.mxu0 0.0
    %60 = vmatpush.msra.mxu0 0.0
    %61 = vmatpush.msra.mxu0 0.0
    %62 = vmatpush.msra.mxu0 0.0
    %63 = vmatpush.msra.mxu0 0.0
    %64 = vmatpush.msra.mxu0 0.0
    %65 = vmatpush.msra.mxu0 0.0
    %66 = vmatpush.msra.mxu0 0.0
    %67 = vmatpush.msra.mxu0 %v50
    %68 = vmatpush.msra.mxu0 %v49
    %69 = vmatpush.msra.mxu0 %v48
    %70 = vmatpush.msra.mxu0 %v47
    %71 = vmatpush.msra.mxu0 %v46
    %72 = vmatpush.msra.mxu0 %v45
    %73 = vmatpush.msra.mxu0 %v44
    %74 = vmatpush.msra.mxu0 %v43
    %75 = vmatmul.f32.gmra.mxu0 %v57
    %v76 = vpop.f32.mrf.mxu0
    %v77 = vadd.f32 %v53, %v76
    %78 = vdwg.mxu0
    %vm79 = vcmp.gt.f32.partialorder %v77, 0.0
    %v80 = vmul.f32 %v77, 0.01
    %v81 = vsel %vm79, %v77, %v80
    %v82 = vld [vmem:[%s5] sm:$0xff]
    %v83 = vld [vmem:[%s5 + $0x8] sm:$0xff]
    %v84 = vld [vmem:[%s5 + $0x10] sm:$0xff]
    %v85 = vld [vmem:[%s5 + $0x18] sm:$0xff]
    %v86 = vld [vmem:[%s7] sm:$0x1]
    %v88 = vperm.slane %v86, 0
    %vm90 = vcmask 261120
    %v92 = vsel %vm90, %v81, 0
    %94 = vmatpush.msra.mxu0 0.0
    %95 = vmatpush.msra.mxu0 0.0
    %96 = vmatpush.msra.mxu0 0.0
    %97 = vmatpush.msra.mxu0 0.0
    %98 = vmatpush.msra.mxu0 0.0
    %99 = vmatpush.msra.mxu0 0.0
    %100 = vmatpush.msra.mxu0 0.0
    %101 = vmatpush.msra.mxu0 0.0
    %102 = vmatpush.msra.mxu0 0.0
    %103 = vmatpush.msra.mxu0 0.0
    %104 = vmatpush.msra.mxu0 0.0
    %105 = vmatpush.msra.mxu0 0.0
    %106 = vmatpush.msra.mxu0 %v85
    %107 = vmatpush.msra.mxu0 %v84
    %108 = vmatpush.msra.mxu0 %v83
    %109 = vmatpush.msra.mxu0 %v82
    %110 = vmatmul.f32.gmra.mxu0 %v92
    %v111 = vpop.f32.mrf.mxu0
    %v112 = vadd.f32 %v88, %v111
    %113 = vdwg.mxu0
    %v114 = vld [vmem:[%s0] sm:$0xff]
    %v115 = vld [vmem:[%s0 + $0x8] sm:$0xff]
    %v116 = vld [vmem:[%s0 + $0x10] sm:$0xff]
    %v117 = vld [vmem:[%s0 + $0x18] sm:$0xff]
    %v118 = vld [vmem:[%s0 + $0x20] sm:$0xff]
    %v119 = vld [vmem:[%s0 + $0x28] sm:$0xff]
    %v120 = vld [vmem:[%s0 + $0x30] sm:$0xff]
    %v121 = vld [vmem:[%s0 + $0x38] sm:$0xff]
    %v122 = vld [vmem:[%s4] sm:$0xff]
    %v123 = vld [vmem:[%s4 + $0x8] sm:$0xff]
    %vm124 = vcmask 130048
    %v126 = vsel %vm124, %v114, 0
    %v129 = vsel %vm124, %v115, 0
    %v132 = vsel %vm124, %v116, 0
    %v135 = vsel %vm124, %v117, 0
    %v138 = vsel %vm124, %v118, 0
    %v141 = vsel %vm124, %v119, 0
    %v144 = vsel %vm124, %v120, 0
    %v147 = vsel %vm124, %v121, 0
    %149 = vmatpush.msra.mxu0 0.0
    %150 = vmatpush.msra.mxu0 0.0
    %151 = vmatpush.msra.mxu0 0.0
    %152 = vmatpush.msra.mxu0 0.0
    %153 = vmatpush.msra.mxu0 0.0
    %154 = vmatpush.msra.mxu0 0.0
    %155 = vmatpush.msra.mxu0 0.0
    %156 = vmatpush.msra.mxu0 0.0
    %157 = vmatpush.msra.mxu0 0.0
    %158 = vmatpush.msra.mxu0 0.0
    %159 = vmatpush.msra.mxu0 0.0
    %160 = vmatpush.msra.mxu0 0.0
    %161 = vmatpush.msra.mxu0 0.0
    %162 = vmatpush.msra.mxu0 0.0
    %163 = vmatpush.msra.mxu0 %v123
    %164 = vmatpush.msra.mxu0 %v122
    %165 = vmatmul.f32.gmra.mxu0 %v126
    %v166 = vpop.f32.mrf.mxu0
    %v167 = vadd.f32 0.0, %v166
    %168 = vmatmul.f32.gmra.mxu0 %v129
    %v169 = vpop.f32.mrf.mxu0
    %v170 = vadd.f32 0.0, %v169
    %171 = vmatmul.f32.gmra.mxu0 %v132
    %v172 = vpop.f32.mrf.mxu0
    %v173 = vadd.f32 0.0, %v172
    %174 = vmatmul.f32.gmra.mxu0 %v135
    %v175 = vpop.f32.mrf.mxu0
    %v176 = vadd.f32 0.0, %v175
    %177 = vmatmul.f32.gmra.mxu0 %v138
    %v178 = vpop.f32.mrf.mxu0
    %v179 = vadd.f32 0.0, %v178
    %180 = vmatmul.f32.gmra.mxu0 %v141
    %v181 = vpop.f32.mrf.mxu0
    %v182 = vadd.f32 0.0, %v181
    %183 = vmatmul.f32.gmra.mxu0 %v144
    %v184 = vpop.f32.mrf.mxu0
    %v185 = vadd.f32 0.0, %v184
    %186 = vmatmul.f32.gmra.mxu0 %v147
    %v187 = vpop.f32.mrf.mxu0
    %v188 = vadd.f32 0.0, %v187
    %189 = vdwg.mxu0
    %190 = vst.msk [vmem:[#allocation2] sm:$0xff] %vm90, %v167
    %191 = vst.msk [vmem:[#allocation2 + $0x8] sm:$0xff] %vm90, %v170
    %192 = vst.msk [vmem:[#allocation2 + $0x10] sm:$0xff] %vm90, %v173
    %193 = vst.msk [vmem:[#allocation2 + $0x18] sm:$0xff] %vm90, %v176
    %194 = vst.msk [vmem:[#allocation2 + $0x20] sm:$0xff] %vm90, %v179
    %195 = vst.msk [vmem:[#allocation2 + $0x28] sm:$0xff] %vm90, %v182
    %196 = vst.msk [vmem:[#allocation2 + $0x30] sm:$0xff] %vm90, %v185
    %197 = vst.msk [vmem:[#allocation2 + $0x38] sm:$0xff] %vm90, %v188
    %v198 = vld [vmem:[%s6] sm:$0xff]
    %v199 = vld [vmem:[%s6 + $0x8] sm:$0xff]
    %v200 = vld [vmem:[%s6 + $0x10] sm:$0xff]
    %v201 = vld [vmem:[%s6 + $0x18] sm:$0xff]
    %v202 = vld [vmem:[%s10] sm:$0xff]
    %v203 = vld [vmem:[#allocation2] sm:$0xff]
    %v204 = vadd.f32 %v203, %v112
    %v206 = vsel %vm90, %v202, 0
    %208 = vmatpush.msra.mxu0 0.0
    %209 = vmatpush.msra.mxu0 0.0
    %210 = vmatpush.msra.mxu0 0.0
    %211 = vmatpush.msra.mxu0 0.0
    %212 = vmatpush.msra.mxu0 0.0
    %213 = vmatpush.msra.mxu0 0.0
    %214 = vmatpush.msra.mxu0 0.0
    %215 = vmatpush.msra.mxu0 0.0
    %216 = vmatpush.msra.mxu0 0.0
    %217 = vmatpush.msra.mxu0 0.0
    %218 = vmatpush.msra.mxu0 0.0
    %219 = vmatpush.msra.mxu0 0.0
    %220 = vmatpush.msra.mxu0 %v201
    %221 = vmatpush.msra.mxu0 %v200
    %222 = vmatpush.msra.mxu0 %v199
    %223 = vmatpush.msra.mxu0 %v198
    %224 = vmatmul.f32.gmra.mxu0 %v206
    %v225 = vpop.f32.mrf.mxu0
    %v226 = vadd.f32 0.0, %v225
    %227 = vdwg.mxu0
    %v228 = vadd.f32 %v204, %v226
    %v229 = vtanh.pop %v228
    %230 = vst.msk [vmem:[#allocation3] sm:$0xff] %vm90, %v229
    %s231 = scalar_lea.vmem [#allocation2], 8
    %v232 = vld [vmem:[%s231] sm:$0xff]
    %v233 = vadd.f32 %v232, %v112
    %v235 = vsel %vm90, %v229, 0
    %237 = vmatpush.msra.mxu0 0.0
    %238 = vmatpush.msra.mxu0 0.0
    %239 = vmatpush.msra.mxu0 0.0
    %240 = vmatpush.msra.mxu0 0.0
    %241 = vmatpush.msra.mxu0 0.0
    %242 = vmatpush.msra.mxu0 0.0
    %243 = vmatpush.msra.mxu0 0.0
    %244 = vmatpush.msra.mxu0 0.0
    %245 = vmatpush.msra.mxu0 0.0
    %246 = vmatpush.msra.mxu0 0.0
    %247 = vmatpush.msra.mxu0 0.0
    %248 = vmatpush.msra.mxu0 0.0
    %249 = vmatpush.msra.mxu0 %v201
    %250 = vmatpush.msra.mxu0 %v200
    %251 = vmatpush.msra.mxu0 %v199
    %252 = vmatpush.msra.mxu0 %v198
    %253 = vmatmul.f32.gmra.mxu0 %v235
    %v254 = vpop.f32.mrf.mxu0
    %v255 = vadd.f32 0.0, %v254
    %256 = vdwg.mxu0
    %v257 = vadd.f32 %v233, %v255
    %v258 = vtanh.pop %v257
    %s259 = scalar_lea.vmem [#allocation3], 8
    %260 = vst.msk [vmem:[%s259] sm:$0xff] %vm90, %v258
    %s261 = scalar_lea.vmem [#allocation2], 16
    %v262 = vld [vmem:[%s261] sm:$0xff]
    %v263 = vadd.f32 %v262, %v112
    %v265 = vsel %vm90, %v258, 0
    %267 = vmatpush.msra.mxu0 0.0
    %268 = vmatpush.msra.mxu0 0.0
    %269 = vmatpush.msra.mxu0 0.0
    %270 = vmatpush.msra.mxu0 0.0
    %271 = vmatpush.msra.mxu0 0.0
    %272 = vmatpush.msra.mxu0 0.0
    %273 = vmatpush.msra.mxu0 0.0
    %274 = vmatpush.msra.mxu0 0.0
    %275 = vmatpush.msra.mxu0 0.0
    %276 = vmatpush.msra.mxu0 0.0
    %277 = vmatpush.msra.mxu0 0.0
    %278 = vmatpush.msra.mxu0 0.0
    %279 = vmatpush.msra.mxu0 %v201
    %280 = vmatpush.msra.mxu0 %v200
    %281 = vmatpush.msra.mxu0 %v199
    %282 = vmatpush.msra.mxu0 %v198
    %283 = vmatmul.f32.gmra.mxu0 %v265
    %v284 = vpop.f32.mrf.mxu0
    %v285 = vadd.f32 0.0, %v284
    %286 = vdwg.mxu0
    %v287 = vadd.f32 %v263, %v285
    %v288 = vtanh.pop %v287
    %s289 = scalar_lea.vmem [#allocation3], 16
    %290 = vst.msk [vmem:[%s289] sm:$0xff] %vm90, %v288
    %s291 = scalar_lea.vmem [#allocation2], 24
    %v292 = vld [vmem:[%s291] sm:$0xff]
    %v293 = vadd.f32 %v292, %v112
    %v295 = vsel %vm90, %v288, 0
    %297 = vmatpush.msra.mxu0 0.0
    %298 = vmatpush.msra.mxu0 0.0
    %299 = vmatpush.msra.mxu0 0.0
    %300 = vmatpush.msra.mxu0 0.0
    %301 = vmatpush.msra.mxu0 0.0
    %302 = vmatpush.msra.mxu0 0.0
    %303 = vmatpush.msra.mxu0 0.0
    %304 = vmatpush.msra.mxu0 0.0
    %305 = vmatpush.msra.mxu0 0.0
    %306 = vmatpush.msra.mxu0 0.0
    %307 = vmatpush.msra.mxu0 0.0
    %308 = vmatpush.msra.mxu0 0.0
    %309 = vmatpush.msra.mxu0 %v201
    %310 = vmatpush.msra.mxu0 %v200
    %311 = vmatpush.msra.mxu0 %v199
    %312 = vmatpush.msra.mxu0 %v198
    %313 = vmatmul.f32.gmra.mxu0 %v295
    %v314 = vpop.f32.mrf.mxu0
    %v315 = vadd.f32 0.0, %v314
    %316 = vdwg.mxu0
    %v317 = vadd.f32 %v293, %v315
    %v318 = vtanh.pop %v317
    %s319 = scalar_lea.vmem [#allocation3], 24
    %320 = vst.msk [vmem:[%s319] sm:$0xff] %vm90, %v318
    %s321 = scalar_lea.vmem [#allocation2], 32
    %v322 = vld [vmem:[%s321] sm:$0xff]
    %v323 = vadd.f32 %v322, %v112
    %v325 = vsel %vm90, %v318, 0
    %327 = vmatpush.msra.mxu0 0.0
    %328 = vmatpush.msra.mxu0 0.0
    %329 = vmatpush.msra.mxu0 0.0
    %330 = vmatpush.msra.mxu0 0.0
    %331 = vmatpush.msra.mxu0 0.0
    %332 = vmatpush.msra.mxu0 0.0
    %333 = vmatpush.msra.mxu0 0.0
    %334 = vmatpush.msra.mxu0 0.0
    %335 = vmatpush.msra.mxu0 0.0
    %336 = vmatpush.msra.mxu0 0.0
    %337 = vmatpush.msra.mxu0 0.0
    %338 = vmatpush.msra.mxu0 0.0
    %339 = vmatpush.msra.mxu0 %v201
    %340 = vmatpush.msra.mxu0 %v200
    %341 = vmatpush.msra.mxu0 %v199
    %342 = vmatpush.msra.mxu0 %v198
    %343 = vmatmul.f32.gmra.mxu0 %v325
    %v344 = vpop.f32.mrf.mxu0
    %v345 = vadd.f32 0.0, %v344
    %346 = vdwg.mxu0
    %v347 = vadd.f32 %v323, %v345
    %v348 = vtanh.pop %v347
    %s349 = scalar_lea.vmem [#allocation3], 32
    %350 = vst.msk [vmem:[%s349] sm:$0xff] %vm90, %v348
    %s351 = scalar_lea.vmem [#allocation2], 40
    %v352 = vld [vmem:[%s351] sm:$0xff]
    %v353 = vadd.f32 %v352, %v112
    %v355 = vsel %vm90, %v348, 0
    %357 = vmatpush.msra.mxu0 0.0
    %358 = vmatpush.msra.mxu0 0.0
    %359 = vmatpush.msra.mxu0 0.0
    %360 = vmatpush.msra.mxu0 0.0
    %361 = vmatpush.msra.mxu0 0.0
    %362 = vmatpush.msra.mxu0 0.0
    %363 = vmatpush.msra.mxu0 0.0
    %364 = vmatpush.msra.mxu0 0.0
    %365 = vmatpush.msra.mxu0 0.0
    %366 = vmatpush.msra.mxu0 0.0
    %367 = vmatpush.msra.mxu0 0.0
    %368 = vmatpush.msra.mxu0 0.0
    %369 = vmatpush.msra.mxu0 %v201
    %370 = vmatpush.msra.mxu0 %v200
    %371 = vmatpush.msra.mxu0 %v199
    %372 = vmatpush.msra.mxu0 %v198
    %373 = vmatmul.f32.gmra.mxu0 %v355
    %v374 = vpop.f32.mrf.mxu0
    %v375 = vadd.f32 0.0, %v374
    %376 = vdwg.mxu0
    %v377 = vadd.f32 %v353, %v375
    %v378 = vtanh.pop %v377
    %s379 = scalar_lea.vmem [#allocation3], 40
    %380 = vst.msk [vmem:[%s379] sm:$0xff] %vm90, %v378
    %s381 = scalar_lea.vmem [#allocation2], 48
    %v382 = vld [vmem:[%s381] sm:$0xff]
    %v383 = vadd.f32 %v382, %v112
    %v385 = vsel %vm90, %v378, 0
    %387 = vmatpush.msra.mxu0 0.0
    %388 = vmatpush.msra.mxu0 0.0
    %389 = vmatpush.msra.mxu0 0.0
    %390 = vmatpush.msra.mxu0 0.0
    %391 = vmatpush.msra.mxu0 0.0
    %392 = vmatpush.msra.mxu0 0.0
    %393 = vmatpush.msra.mxu0 0.0
    %394 = vmatpush.msra.mxu0 0.0
    %395 = vmatpush.msra.mxu0 0.0
    %396 = vmatpush.msra.mxu0 0.0
    %397 = vmatpush.msra.mxu0 0.0
    %398 = vmatpush.msra.mxu0 0.0
    %399 = vmatpush.msra.mxu0 %v201
    %400 = vmatpush.msra.mxu0 %v200
    %401 = vmatpush.msra.mxu0 %v199
    %402 = vmatpush.msra.mxu0 %v198
    %403 = vmatmul.f32.gmra.mxu0 %v385
    %v404 = vpop.f32.mrf.mxu0
    %v405 = vadd.f32 0.0, %v404
    %406 = vdwg.mxu0
    %v407 = vadd.f32 %v383, %v405
    %v408 = vtanh.pop %v407
    %s409 = scalar_lea.vmem [#allocation3], 48
    %410 = vst.msk [vmem:[%s409] sm:$0xff] %vm90, %v408
    %s411 = scalar_lea.vmem [#allocation2], 56
    %v412 = vld [vmem:[%s411] sm:$0xff]
    %v413 = vadd.f32 %v412, %v112
    %v415 = vsel %vm90, %v408, 0
    %417 = vmatpush.msra.mxu0 0.0
    %418 = vmatpush.msra.mxu0 0.0
    %419 = vmatpush.msra.mxu0 0.0
    %420 = vmatpush.msra.mxu0 0.0
    %421 = vmatpush.msra.mxu0 0.0
    %422 = vmatpush.msra.mxu0 0.0
    %423 = vmatpush.msra.mxu0 0.0
    %424 = vmatpush.msra.mxu0 0.0
    %425 = vmatpush.msra.mxu0 0.0
    %426 = vmatpush.msra.mxu0 0.0
    %427 = vmatpush.msra.mxu0 0.0
    %428 = vmatpush.msra.mxu0 0.0
    %429 = vmatpush.msra.mxu0 %v201
    %430 = vmatpush.msra.mxu0 %v200
    %431 = vmatpush.msra.mxu0 %v199
    %432 = vmatpush.msra.mxu0 %v198
    %433 = vmatmul.f32.gmra.mxu0 %v415
    %v434 = vpop.f32.mrf.mxu0
    %v435 = vadd.f32 0.0, %v434
    %436 = vdwg.mxu0
    %v437 = vadd.f32 %v413, %v435
    %v438 = vtanh.pop %v437
    %s439 = scalar_lea.vmem [#allocation3], 56
    %440 = vst.msk [vmem:[%s439] sm:$0xff] %vm90, %v438
    %441 = vst.msk [vmem:[#allocation6] sm:$0xff] %vm90, %v438
    %v442 = vld [vmem:[#allocation3] sm:$0xff]
    %v443 = vld [vmem:[#allocation3 + $0x8] sm:$0xff]
    %v444 = vld [vmem:[#allocation3 + $0x10] sm:$0xff]
    %v445 = vld [vmem:[#allocation3 + $0x18] sm:$0xff]
    %v446 = vld [vmem:[#allocation3 + $0x20] sm:$0xff]
    %v447 = vld [vmem:[#allocation3 + $0x28] sm:$0xff]
    %v448 = vld [vmem:[#allocation3 + $0x30] sm:$0xff]
    %v449 = vld [vmem:[#allocation3 + $0x38] sm:$0xff]
    %v450 = vld [vmem:[%s8] sm:$0xff]
    %v451 = vld [vmem:[%s8 + $0x8] sm:$0xff]
    %v452 = vld [vmem:[%s8 + $0x10] sm:$0xff]
    %v453 = vld [vmem:[%s8 + $0x18] sm:$0xff]
    %v454 = vld [vmem:[%s9] sm:$0x1]
    %v456 = vperm.slane %v454, 0
    %v459 = vsel %vm90, %v442, 0
    %v462 = vsel %vm90, %v443, 0
    %v465 = vsel %vm90, %v444, 0
    %v468 = vsel %vm90, %v445, 0
    %v471 = vsel %vm90, %v446, 0
    %v474 = vsel %vm90, %v447, 0
    %v477 = vsel %vm90, %v448, 0
    %v480 = vsel %vm90, %v449, 0
    %482 = vmatpush.msra.mxu0 0.0
    %483 = vmatpush.msra.mxu0 0.0
    %484 = vmatpush.msra.mxu0 0.0
    %485 = vmatpush.msra.mxu0 0.0
    %486 = vmatpush.msra.mxu0 0.0
    %487 = vmatpush.msra.mxu0 0.0
    %488 = vmatpush.msra.mxu0 0.0
    %489 = vmatpush.msra.mxu0 0.0
    %490 = vmatpush.msra.mxu0 0.0
    %491 = vmatpush.msra.mxu0 0.0
    %492 = vmatpush.msra.mxu0 0.0
    %493 = vmatpush.msra.mxu0 0.0
    %494 = vmatpush.msra.mxu0 %v453
    %495 = vmatpush.msra.mxu0 %v452
    %496 = vmatpush.msra.mxu0 %v451
    %497 = vmatpush.msra.mxu0 %v450
    %498 = vmatmul.f32.gmra.mxu0 %v459
    %v499 = vpop.f32.mrf.mxu0
    %v500 = vadd.f32 %v456, %v499
    %501 = vmatmul.f32.gmra.mxu0 %v462
    %v502 = vpop.f32.mrf.mxu0
    %v503 = vadd.f32 %v456, %v502
    %504 = vmatmul.f32.gmra.mxu0 %v465
    %v505 = vpop.f32.mrf.mxu0
    %v506 = vadd.f32 %v456, %v505
    %507 = vmatmul.f32.gmra.mxu0 %v468
    %v508 = vpop.f32.mrf.mxu0
    %v509 = vadd.f32 %v456, %v508
    %510 = vmatmul.f32.gmra.mxu0 %v471
    %v511 = vpop.f32.mrf.mxu0
    %v512 = vadd.f32 %v456, %v511
    %513 = vmatmul.f32.gmra.mxu0 %v474
    %v514 = vpop.f32.mrf.mxu0
    %v515 = vadd.f32 %v456, %v514
    %516 = vmatmul.f32.gmra.mxu0 %v477
    %v517 = vpop.f32.mrf.mxu0
    %v518 = vadd.f32 %v456, %v517
    %519 = vmatmul.f32.gmra.mxu0 %v480
    %v520 = vpop.f32.mrf.mxu0
    %v521 = vadd.f32 %v456, %v520
    %522 = vdwg.mxu0
    %523 = vst [vmem:[#allocation4] sm:$0xff] %v500
    %524 = vst [vmem:[#allocation4 + $0x8] sm:$0xff] %v503
    %525 = vst [vmem:[#allocation4 + $0x10] sm:$0xff] %v506
    %526 = vst [vmem:[#allocation4 + $0x18] sm:$0xff] %v509
    %527 = vst [vmem:[#allocation4 + $0x20] sm:$0xff] %v512
    %528 = vst [vmem:[#allocation4 + $0x28] sm:$0xff] %v515
    %529 = vst [vmem:[#allocation4 + $0x30] sm:$0xff] %v518
    %530 = vst [vmem:[#allocation4 + $0x38] sm:$0xff] %v521
    // Predicated region
    $region46: #{tpu_custom_call.1} parent=1 // pred_check
      _
    $region47: #{tpu_custom_call.1} parent=1 // pred_check_branch
      %532 = sbr.rel (0) target = $region49
    $region48: #{tpu_custom_call.1} parent=1 // pred_region
      %534 = vsyncadd [#allocation5], 0
      %s535 = sshll.u32 [#allocation4], 4
      %s536 = int_to_ptr.vmem [resolvable:$true] %s535
      %s537 = sshll.u32 %s11, 4
      %s538 = int_to_ptr.hbm [resolvable:$true] %s537
      %543 = dma.vmem_to_hbm [thread:$0]  %s536, 1024, %s538, [#allocation5], 128, 128, 8
    $region49: #{tpu_custom_call.1} parent=1 // pred_fallthru
      _
    // Predicated region
    $region50: #{tpu_custom_call.1} parent=1 // pred_check
      _
    $region51: #{tpu_custom_call.1} parent=1 // pred_check_branch
      %545 = sbr.rel (0) target = $region53
    $region52: #{tpu_custom_call.1} parent=1 // pred_region
      %547 = vsyncadd [#allocation7], 0
      %s549 = sshll.u32 [#allocation6], 4
      %s550 = int_to_ptr.vmem [resolvable:$true] %s549
      %s551 = sshll.u32 %s12, 4
      %s552 = int_to_ptr.hbm [resolvable:$true] %s551
      %554 = dma.vmem_to_hbm [thread:$0]  %s550, 128, %s552, [#allocation7]
    $region53: #{tpu_custom_call.1} parent=1 // pred_fallthru
      _
    // Predicated region
    $region54: #{tpu_custom_call.1} parent=1 // pred_check
      _
    $region55: #{tpu_custom_call.1} parent=1 // pred_check_branch
      %556 = sbr.rel (0) target = $region57
    $region56: #{tpu_custom_call.1} parent=1 // pred_region
      %558 = dma.done [#allocation5], 1024
    $region57: #{tpu_custom_call.1} parent=1 // pred_fallthru
      _
    // Predicated region
    $region58: #{tpu_custom_call.1} parent=1 // pred_check
      _
    $region59: #{tpu_custom_call.1} parent=1 // pred_check_branch
      %560 = sbr.rel (0) target = $region61
    $region60: #{tpu_custom_call.1} parent=1 // pred_region
      %562 = dma.done [#allocation7], 128
    $region61: #{tpu_custom_call.1} parent=1 // pred_fallthru
      _
    %563 = vsyncpa [#allocation5], 1
    %564 = vsyncpa [#allocation7], 1

</llo_original>
